<compile_context>
chip_gen: v7x
topology: tpu7x:2x2x1
jax: 0.10.0
libtpu: 0.0.40
codegen_flags: <defaults>
</compile_context>

<pallas_src>
import jax
import jax.numpy as jnp
from jax.experimental import pallas as pl
from jax.experimental.pallas import tpu as pltpu


def _round_up(n, m):
    return ((n + m - 1) // m) * m


def _affine(w, b, x):
    """Compute W @ X + b with unrolled VPU broadcast-FMAs.

    w: (out, in), b: (out, 1), x: (in, Bt)  ->  (out, Bt)
    in/out are tiny (<=5), so a static unrolled loop of broadcast multiply-adds
    avoids MXU push/drain latency entirely.
    """
    out_dim, in_dim = w.shape
    acc = jnp.broadcast_to(b, (out_dim, x.shape[1]))
    for k in range(in_dim):
        acc = acc + w[:, k:k + 1] * x[k:k + 1, :]
    return acc


def _sigmoid(z):
    # Single EUP tanh instead of exp + divide (halves transcendental count).
    return 0.5 * jnp.tanh(0.5 * z) + 0.5


def _net_kernel(x_ref, w1_ref, b1_ref, w2_ref, b2_ref, w3_ref, b3_ref, o_ref):
    x = x_ref[...]                                              # (2, Bt)

    # fc1 + sigmoid
    h1 = _sigmoid(_affine(w1_ref[...], b1_ref[...], x))         # (5, Bt)

    # fc2 + sigmoid
    h2 = _sigmoid(_affine(w2_ref[...], b2_ref[...], h1))        # (4, Bt)

    # fc3 + softmax over the feature axis (axis 0 in feature-first layout,
    # which is dim=1 of the original (B, F) layout).
    logits = _affine(w3_ref[...], b3_ref[...], h2)              # (3, Bt)
    m = jnp.max(logits, axis=0, keepdims=True)
    e = jnp.exp(logits - m)
    denom = jnp.sum(e, axis=0, keepdims=True)
    # EUP approximate reciprocal + one Newton refinement (~f32 accuracy),
    # instead of a VALU divide.
    r = pl.reciprocal(denom, approx=True)
    r = r * (2.0 - denom * r)
    o_ref[...] = e * r


def net_forward_feature_first(xt, params, *, batch_tile=65536):
    """Feature-first fast path.

    xt: (2, B) float32 (features, batch); returns (3, B).
    Producers/consumers that can keep this layout avoid all wrapper-side
    transpose passes over HBM.
    """
    F, B = xt.shape
    w1, b1 = params["w1"], params["b1"]   # (5, 2), (5,)
    w2, b2 = params["w2"], params["b2"]   # (4, 5), (4,)
    w3, b3 = params["w3"], params["b3"]   # (3, 4), (3,)

    # Lane-dense batch tile (multiple of 128), large enough to amortize the
    # ~0.35us/step pipeline overhead, capped so VMEM stays well under the
    # v7x 64 MiB physical limit.
    bt = min(batch_tile, _round_up(B, 128))
    # Give the "parallel" batch axis at least 2 steps when there is enough
    # work, so both v7x TensorCores are fed.
    if B > 2 * 128 and pl.cdiv(B, bt) < 2:
        bt = _round_up(pl.cdiv(B, 2), 128)
    nt = pl.cdiv(B, bt)   # partial last block: OOB reads garbage, OOB stores masked

    # Biases as (out, 1) columns so they broadcast along the lane (batch) axis.
    b1c = b1.reshape(-1, 1)
    b2c = b2.reshape(-1, 1)
    b3c = b3.reshape(-1, 1)

    def resident(shape):
        # Weights/biases: full block, constant block index -> stay in VMEM.
        return pl.BlockSpec(shape, lambda i: (0, 0))

    # Advisory cost estimate: kernel-visible HBM traffic (no padding passes).
    n_params = (5 * 2 + 5) + (4 * 5 + 4) + (3 * 4 + 3)
    flops = 2 * B * (2 * 5 + 5 * 4 + 4 * 3)
    transcendentals = B * (5 + 4 + 3 + 1)          # 9 tanh + 3 exp + 1 recip
    bytes_accessed = 4 * (B * (F + 3) + n_params)

    out_t = pl.pallas_call(
        _net_kernel,
        out_shape=jax.ShapeDtypeStruct((3, B), jnp.float32),
        grid=(nt,),
        in_specs=[
            pl.BlockSpec((F, bt), lambda i: (0, i)),   # streamed x tile
            resident(w1.shape), resident(b1c.shape),
            resident(w2.shape), resident(b2c.shape),
            resident(w3.shape), resident(b3c.shape),
        ],
        out_specs=pl.BlockSpec((3, bt), lambda i: (0, i)),  # lane-dense stores
        compiler_params=pltpu.CompilerParams(
            dimension_semantics=("parallel",),          # v7x: split batch over 2 TCs
            vmem_limit_bytes=48 * 1024 * 1024,          # < 64 MiB (v7x physical)
        ),
        cost_estimate=pl.CostEstimate(
            flops=flops,
            transcendentals=transcendentals,
            bytes_accessed=bytes_accessed,
        ),
    )(xt, w1, b1c, w2, b2c, w3, b3c)

    return out_t   # (3, B)


def net_forward(x, params, *, batch_tile=65536):
    """PyTorch-compatible wrapper: x (B, 2) float32 -> (B, 3).

    The two transposes here are plain XLA copies; use
    net_forward_feature_first directly to avoid them when the surrounding
    model can work in (features, batch) layout.
    """
    out_t = net_forward_feature_first(x.T, params, batch_tile=batch_tile)
    return out_t.T


def init_params(key):
    """Deterministic init mimicking nn.Linear default (uniform +-1/sqrt(fan_in)).

    Weights stored in PyTorch layout: (out_features, in_features).
    """
    dims = [(2, 5), (5, 4), (4, 3)]
    params = {}
    for i, (fan_in, fan_out) in enumerate(dims, start=1):
        key, kw, kb = jax.random.split(key, 3)
        bound = 1.0 / jnp.sqrt(float(fan_in))
        params[f"w{i}"] = jax.random.uniform(
            kw, (fan_out, fan_in), jnp.float32, minval=-bound, maxval=bound)
        params[f"b{i}"] = jax.random.uniform(
            kb, (fan_out,), jnp.float32, minval=-bound, maxval=bound)
    return params


def net_forward_ref(x, params):
    """Pure-JAX reference for correctness checking (PyTorch semantics)."""
    h1 = jax.nn.sigmoid(x @ params["w1"].T + params["b1"])
    h2 = jax.nn.sigmoid(h1 @ params["w2"].T + params["b2"])
    logits = h2 @ params["w3"].T + params["b3"]
    return jax.nn.softmax(logits, axis=1)


if __name__ == "__main__":
    key = jax.random.PRNGKey(0)
    key, kx = jax.random.split(key)

    B = 300
    x = jax.random.normal(kx, (B, 2), jnp.float32)
    params = init_params(key)

    # B=300 -> bt=256, grid of 2 partial-friendly tiles (exercises the
    # pl.cdiv partial-block path and the 2-step "parallel" batch axis).
    out = net_forward(x, params)
    out = jax.block_until_ready(out)

    ref = net_forward_ref(x, params)
    assert out.shape == (B, 3)
    assert jnp.allclose(out, ref, atol=1e-5, rtol=1e-5)
    # softmax rows sum to 1
    assert jnp.allclose(jnp.sum(out, axis=1), jnp.ones((B,)), atol=1e-5)

    print("KERNEL_OK")
</pallas_src>

<mosaic_0001>
module attributes {stable_mosaic.version = 11 : i64} {
  func.func @_net_kernel(%arg0: i32, %arg1: memref<2x256xf32, #tpu.memory_space<vmem>>, %arg2: memref<5x2xf32, #tpu.memory_space<vmem>>, %arg3: memref<5x1xf32, #tpu.memory_space<vmem>>, %arg4: memref<4x5xf32, #tpu.memory_space<vmem>>, %arg5: memref<4x1xf32, #tpu.memory_space<vmem>>, %arg6: memref<3x4xf32, #tpu.memory_space<vmem>>, %arg7: memref<3x1xf32, #tpu.memory_space<vmem>>, %arg8: memref<3x256xf32, #tpu.memory_space<vmem>>) attributes {dimension_semantics = [#tpu.dimension_semantics<parallel>], iteration_bounds = array<i64: 2>, scalar_prefetch = 0 : i64, scratch_operands = 0 : i64, tpu.core_type = #tpu.core_type<tc>, window_params = [{transform_indices = @transform_0, window_bounds = array<i64: 2, 256>}, {pipeline_mode = #tpu.pipeline_mode<synchronous>, transform_indices = @transform_1, window_bounds = array<i64: 5, 2>}, {pipeline_mode = #tpu.pipeline_mode<synchronous>, transform_indices = @transform_2, window_bounds = array<i64: 5, 1>}, {pipeline_mode = #tpu.pipeline_mode<synchronous>, transform_indices = @transform_3, window_bounds = array<i64: 4, 5>}, {pipeline_mode = #tpu.pipeline_mode<synchronous>, transform_indices = @transform_4, window_bounds = array<i64: 4, 1>}, {pipeline_mode = #tpu.pipeline_mode<synchronous>, transform_indices = @transform_5, window_bounds = array<i64: 3, 4>}, {pipeline_mode = #tpu.pipeline_mode<synchronous>, transform_indices = @transform_6, window_bounds = array<i64: 3, 1>}, {transform_indices = @transform_7, window_bounds = array<i64: 3, 256>}]} {
    %c0 = arith.constant 0 : index
    %c0_0 = arith.constant 0 : index
    %0 = vector.load %arg1[%c0, %c0_0] : memref<2x256xf32, #tpu.memory_space<vmem>>, vector<2x256xf32>
    %c0_1 = arith.constant 0 : index
    %c0_2 = arith.constant 0 : index
    %1 = vector.load %arg2[%c0_1, %c0_2] : memref<5x2xf32, #tpu.memory_space<vmem>>, vector<5x2xf32>
    %c0_3 = arith.constant 0 : index
    %c0_4 = arith.constant 0 : index
    %2 = vector.load %arg3[%c0_3, %c0_4] : memref<5x1xf32, #tpu.memory_space<vmem>>, vector<5x1xf32>
    %3 = vector.shape_cast %2 : vector<5x1xf32> to vector<5x1xf32>
    %4 = vector.broadcast %3 : vector<5x1xf32> to vector<5x256xf32>
    %5 = vector.extract_strided_slice %1 {offsets = [0, 0], sizes = [5, 1], strides = [1, 1]} : vector<5x2xf32> to vector<5x1xf32>
    %6 = vector.extract_strided_slice %0 {offsets = [0, 0], sizes = [1, 256], strides = [1, 1]} : vector<2x256xf32> to vector<1x256xf32>
    %7 = vector.broadcast %5 : vector<5x1xf32> to vector<5x256xf32>
    %8 = vector.broadcast %6 : vector<1x256xf32> to vector<5x256xf32>
    %9 = arith.mulf %7, %8 : vector<5x256xf32>
    %10 = arith.addf %4, %9 : vector<5x256xf32>
    %11 = vector.extract_strided_slice %1 {offsets = [0, 1], sizes = [5, 1], strides = [1, 1]} : vector<5x2xf32> to vector<5x1xf32>
    %12 = vector.extract_strided_slice %0 {offsets = [1, 0], sizes = [1, 256], strides = [1, 1]} : vector<2x256xf32> to vector<1x256xf32>
    %13 = vector.broadcast %11 : vector<5x1xf32> to vector<5x256xf32>
    %14 = vector.broadcast %12 : vector<1x256xf32> to vector<5x256xf32>
    %15 = arith.mulf %13, %14 : vector<5x256xf32>
    %16 = arith.addf %10, %15 : vector<5x256xf32>
    %cst = arith.constant 5.000000e-01 : f32
    %17 = vector.broadcast %cst : f32 to vector<5x256xf32>
    %18 = arith.mulf %17, %16 : vector<5x256xf32>
    %19 = math.tanh %18 : vector<5x256xf32>
    %cst_5 = arith.constant 5.000000e-01 : f32
    %20 = vector.broadcast %cst_5 : f32 to vector<5x256xf32>
    %21 = arith.mulf %20, %19 : vector<5x256xf32>
    %cst_6 = arith.constant 5.000000e-01 : f32
    %22 = vector.broadcast %cst_6 : f32 to vector<5x256xf32>
    %23 = arith.addf %21, %22 : vector<5x256xf32>
    %c0_7 = arith.constant 0 : index
    %c0_8 = arith.constant 0 : index
    %24 = vector.load %arg4[%c0_7, %c0_8] : memref<4x5xf32, #tpu.memory_space<vmem>>, vector<4x5xf32>
    %c0_9 = arith.constant 0 : index
    %c0_10 = arith.constant 0 : index
    %25 = vector.load %arg5[%c0_9, %c0_10] : memref<4x1xf32, #tpu.memory_space<vmem>>, vector<4x1xf32>
    %26 = vector.shape_cast %25 : vector<4x1xf32> to vector<4x1xf32>
    %27 = vector.broadcast %26 : vector<4x1xf32> to vector<4x256xf32>
    %28 = vector.extract_strided_slice %24 {offsets = [0, 0], sizes = [4, 1], strides = [1, 1]} : vector<4x5xf32> to vector<4x1xf32>
    %29 = vector.extract_strided_slice %23 {offsets = [0, 0], sizes = [1, 256], strides = [1, 1]} : vector<5x256xf32> to vector<1x256xf32>
    %30 = vector.broadcast %28 : vector<4x1xf32> to vector<4x256xf32>
    %31 = vector.broadcast %29 : vector<1x256xf32> to vector<4x256xf32>
    %32 = arith.mulf %30, %31 : vector<4x256xf32>
    %33 = arith.addf %27, %32 : vector<4x256xf32>
    %34 = vector.extract_strided_slice %24 {offsets = [0, 1], sizes = [4, 1], strides = [1, 1]} : vector<4x5xf32> to vector<4x1xf32>
    %35 = vector.extract_strided_slice %23 {offsets = [1, 0], sizes = [1, 256], strides = [1, 1]} : vector<5x256xf32> to vector<1x256xf32>
    %36 = vector.broadcast %34 : vector<4x1xf32> to vector<4x256xf32>
    %37 = vector.broadcast %35 : vector<1x256xf32> to vector<4x256xf32>
    %38 = arith.mulf %36, %37 : vector<4x256xf32>
    %39 = arith.addf %33, %38 : vector<4x256xf32>
    %40 = vector.extract_strided_slice %24 {offsets = [0, 2], sizes = [4, 1], strides = [1, 1]} : vector<4x5xf32> to vector<4x1xf32>
    %41 = vector.extract_strided_slice %23 {offsets = [2, 0], sizes = [1, 256], strides = [1, 1]} : vector<5x256xf32> to vector<1x256xf32>
    %42 = vector.broadcast %40 : vector<4x1xf32> to vector<4x256xf32>
    %43 = vector.broadcast %41 : vector<1x256xf32> to vector<4x256xf32>
    %44 = arith.mulf %42, %43 : vector<4x256xf32>
    %45 = arith.addf %39, %44 : vector<4x256xf32>
    %46 = vector.extract_strided_slice %24 {offsets = [0, 3], sizes = [4, 1], strides = [1, 1]} : vector<4x5xf32> to vector<4x1xf32>
    %47 = vector.extract_strided_slice %23 {offsets = [3, 0], sizes = [1, 256], strides = [1, 1]} : vector<5x256xf32> to vector<1x256xf32>
    %48 = vector.broadcast %46 : vector<4x1xf32> to vector<4x256xf32>
    %49 = vector.broadcast %47 : vector<1x256xf32> to vector<4x256xf32>
    %50 = arith.mulf %48, %49 : vector<4x256xf32>
    %51 = arith.addf %45, %50 : vector<4x256xf32>
    %52 = vector.extract_strided_slice %24 {offsets = [0, 4], sizes = [4, 1], strides = [1, 1]} : vector<4x5xf32> to vector<4x1xf32>
    %53 = vector.extract_strided_slice %23 {offsets = [4, 0], sizes = [1, 256], strides = [1, 1]} : vector<5x256xf32> to vector<1x256xf32>
    %54 = vector.broadcast %52 : vector<4x1xf32> to vector<4x256xf32>
    %55 = vector.broadcast %53 : vector<1x256xf32> to vector<4x256xf32>
    %56 = arith.mulf %54, %55 : vector<4x256xf32>
    %57 = arith.addf %51, %56 : vector<4x256xf32>
    %cst_11 = arith.constant 5.000000e-01 : f32
    %58 = vector.broadcast %cst_11 : f32 to vector<4x256xf32>
    %59 = arith.mulf %58, %57 : vector<4x256xf32>
    %60 = math.tanh %59 : vector<4x256xf32>
    %cst_12 = arith.constant 5.000000e-01 : f32
    %61 = vector.broadcast %cst_12 : f32 to vector<4x256xf32>
    %62 = arith.mulf %61, %60 : vector<4x256xf32>
    %cst_13 = arith.constant 5.000000e-01 : f32
    %63 = vector.broadcast %cst_13 : f32 to vector<4x256xf32>
    %64 = arith.addf %62, %63 : vector<4x256xf32>
    %c0_14 = arith.constant 0 : index
    %c0_15 = arith.constant 0 : index
    %65 = vector.load %arg6[%c0_14, %c0_15] : memref<3x4xf32, #tpu.memory_space<vmem>>, vector<3x4xf32>
    %c0_16 = arith.constant 0 : index
    %c0_17 = arith.constant 0 : index
    %66 = vector.load %arg7[%c0_16, %c0_17] : memref<3x1xf32, #tpu.memory_space<vmem>>, vector<3x1xf32>
    %67 = vector.shape_cast %66 : vector<3x1xf32> to vector<3x1xf32>
    %68 = vector.broadcast %67 : vector<3x1xf32> to vector<3x256xf32>
    %69 = vector.extract_strided_slice %65 {offsets = [0, 0], sizes = [3, 1], strides = [1, 1]} : vector<3x4xf32> to vector<3x1xf32>
    %70 = vector.extract_strided_slice %64 {offsets = [0, 0], sizes = [1, 256], strides = [1, 1]} : vector<4x256xf32> to vector<1x256xf32>
    %71 = vector.broadcast %69 : vector<3x1xf32> to vector<3x256xf32>
    %72 = vector.broadcast %70 : vector<1x256xf32> to vector<3x256xf32>
    %73 = arith.mulf %71, %72 : vector<3x256xf32>
    %74 = arith.addf %68, %73 : vector<3x256xf32>
    %75 = vector.extract_strided_slice %65 {offsets = [0, 1], sizes = [3, 1], strides = [1, 1]} : vector<3x4xf32> to vector<3x1xf32>
    %76 = vector.extract_strided_slice %64 {offsets = [1, 0], sizes = [1, 256], strides = [1, 1]} : vector<4x256xf32> to vector<1x256xf32>
    %77 = vector.broadcast %75 : vector<3x1xf32> to vector<3x256xf32>
    %78 = vector.broadcast %76 : vector<1x256xf32> to vector<3x256xf32>
    %79 = arith.mulf %77, %78 : vector<3x256xf32>
    %80 = arith.addf %74, %79 : vector<3x256xf32>
    %81 = vector.extract_strided_slice %65 {offsets = [0, 2], sizes = [3, 1], strides = [1, 1]} : vector<3x4xf32> to vector<3x1xf32>
    %82 = vector.extract_strided_slice %64 {offsets = [2, 0], sizes = [1, 256], strides = [1, 1]} : vector<4x256xf32> to vector<1x256xf32>
    %83 = vector.broadcast %81 : vector<3x1xf32> to vector<3x256xf32>
    %84 = vector.broadcast %82 : vector<1x256xf32> to vector<3x256xf32>
    %85 = arith.mulf %83, %84 : vector<3x256xf32>
    %86 = arith.addf %80, %85 : vector<3x256xf32>
    %87 = vector.extract_strided_slice %65 {offsets = [0, 3], sizes = [3, 1], strides = [1, 1]} : vector<3x4xf32> to vector<3x1xf32>
    %88 = vector.extract_strided_slice %64 {offsets = [3, 0], sizes = [1, 256], strides = [1, 1]} : vector<4x256xf32> to vector<1x256xf32>
    %89 = vector.broadcast %87 : vector<3x1xf32> to vector<3x256xf32>
    %90 = vector.broadcast %88 : vector<1x256xf32> to vector<3x256xf32>
    %91 = arith.mulf %89, %90 : vector<3x256xf32>
    %92 = arith.addf %86, %91 : vector<3x256xf32>
    %cst_18 = arith.constant dense<0xFF800000> : vector<256xf32>
    %93 = vector.multi_reduction <maximumf>, %92, %cst_18 [0] : vector<3x256xf32> to vector<256xf32>
    %94 = vector.shape_cast %93 : vector<256xf32> to vector<1x256xf32>
    %95 = vector.broadcast %94 : vector<1x256xf32> to vector<3x256xf32>
    %96 = arith.subf %92, %95 : vector<3x256xf32>
    %97 = math.exp %96 : vector<3x256xf32>
    %cst_19 = arith.constant dense<0.000000e+00> : vector<256xf32>
    %98 = vector.multi_reduction <add>, %97, %cst_19 [0] : vector<3x256xf32> to vector<256xf32>
    %99 = vector.shape_cast %98 : vector<256xf32> to vector<1x256xf32>
    %100 = tpu.reciprocal %99 {approx = true} : vector<1x256xf32> -> vector<1x256xf32>
    %101 = arith.mulf %99, %100 : vector<1x256xf32>
    %cst_20 = arith.constant 2.000000e+00 : f32
    %102 = vector.broadcast %cst_20 : f32 to vector<1x256xf32>
    %103 = arith.subf %102, %101 : vector<1x256xf32>
    %104 = arith.mulf %100, %103 : vector<1x256xf32>
    %105 = vector.broadcast %104 : vector<1x256xf32> to vector<3x256xf32>
    %106 = arith.mulf %97, %105 : vector<3x256xf32>
    %c0_21 = arith.constant 0 : index
    %c0_22 = arith.constant 0 : index
    %107 = vector.load %arg8[%c0_21, %c0_22] : memref<3x256xf32, #tpu.memory_space<vmem>>, vector<3x256xf32>
    tpu.vector_store %arg8[%c0_21, %c0_22], %106 {strides = array<i32>} : memref<3x256xf32, #tpu.memory_space<vmem>>, vector<3x256xf32>,
    return
  }
  func.func @transform_0(%arg0: i32) -> (i32, i32) {
    %c0_i32 = arith.constant 0 : i32
    %c0_i32_0 = arith.constant 0 : i32
    return %c0_i32, %arg0 : i32, i32
  }
  func.func @transform_1(%arg0: i32) -> (i32, i32) {
    %c0_i32 = arith.constant 0 : i32
    %c0_i32_0 = arith.constant 0 : i32
    %c0_i32_1 = arith.constant 0 : i32
    return %c0_i32, %c0_i32_0 : i32, i32
  }
  func.func @transform_2(%arg0: i32) -> (i32, i32) {
    %c0_i32 = arith.constant 0 : i32
    %c0_i32_0 = arith.constant 0 : i32
    %c0_i32_1 = arith.constant 0 : i32
    return %c0_i32, %c0_i32_0 : i32, i32
  }
  func.func @transform_3(%arg0: i32) -> (i32, i32) {
    %c0_i32 = arith.constant 0 : i32
    %c0_i32_0 = arith.constant 0 : i32
    %c0_i32_1 = arith.constant 0 : i32
    return %c0_i32, %c0_i32_0 : i32, i32
  }
  func.func @transform_4(%arg0: i32) -> (i32, i32) {
    %c0_i32 = arith.constant 0 : i32
    %c0_i32_0 = arith.constant 0 : i32
    %c0_i32_1 = arith.constant 0 : i32
    return %c0_i32, %c0_i32_0 : i32, i32
  }
  func.func @transform_5(%arg0: i32) -> (i32, i32) {
    %c0_i32 = arith.constant 0 : i32
    %c0_i32_0 = arith.constant 0 : i32
    %c0_i32_1 = arith.constant 0 : i32
    return %c0_i32, %c0_i32_0 : i32, i32
  }
  func.func @transform_6(%arg0: i32) -> (i32, i32) {
    %c0_i32 = arith.constant 0 : i32
    %c0_i32_0 = arith.constant 0 : i32
    %c0_i32_1 = arith.constant 0 : i32
    return %c0_i32, %c0_i32_0 : i32, i32
  }
  func.func @transform_7(%arg0: i32) -> (i32, i32) {
    %c0_i32 = arith.constant 0 : i32
    %c0_i32_0 = arith.constant 0 : i32
    return %c0_i32, %arg0 : i32, i32
  }
}

</mosaic_0001>

<llo_original>
// kernel: tpu_custom_call.1
$region0: #{tpu_custom_call.1}
  #allocation0 [shape = 'u32[]', space=smem, size = 0x4, offset = 0x4, fixed_abs, tag = 'smem constant byte address 0x4 - core index']
  #allocation1 [shape = 'u32[144,128]{1,0:T(1,128)}', space=vmem, size = 0x12000, scoped, tag = 'internal scratch']
  %s0 = inlined_call_operand.vmem [shape: f32[2,300], index: 0, kind: input, shape index: {}]
  %s1 = inlined_call_operand.vmem [shape: f32[5,2], index: 1, kind: input, shape index: {}]
  %s2 = inlined_call_operand.vmem [shape: f32[5,1], index: 2, kind: input, shape index: {}]
  %s3 = inlined_call_operand.vmem [shape: f32[4,5], index: 3, kind: input, shape index: {}]
  %s4 = inlined_call_operand.vmem [shape: f32[4,1], index: 4, kind: input, shape index: {}]
  %s5 = inlined_call_operand.vmem [shape: f32[3,4], index: 5, kind: input, shape index: {}]
  %s6 = inlined_call_operand.vmem [shape: f32[3,1], index: 6, kind: input, shape index: {}]
  %s7 = inlined_call_operand.hbm [shape: f32[3,300], index: 7, kind: output, shape index: {}]
  %s8 = sld [smem:[#allocation0]]
  $region61: #{tpu_custom_call.1} parent=0
    _
  %s10 = ssub.s32 1, %s8
  %s11 = scalar_select 0, %s10, %s8
  $region1: #{tpu_custom_call.1} parent=0
    #allocation2 [shape = 'u8[8192]{0}', space=vmem, size = 0x2000, scoped, tag = 'output window, operand 0']
    #allocation3 [shape = 's32[2]{0}', space=sflag, size = 0x8, scoped, tag = 'scoped memory for tpu_custom_call.1']
    %12 = vsyncpa [#allocation3], 0
    %s13 = scalar_lea.sflag [#allocation3], 1
    %14 = vsyncpa %s13, 0
    loop: start=0, step=1, limit=4
    $region2: #{tpu_custom_call.1} parent=1 // loop_pre_header
      _
    $region3: #{tpu_custom_call.1} parent=1 // loop_header
      %s16 = sphi 0, %s20
      %p17 = scmp.ge.s32.totalorder %s16, 4
      %s26 = sphi 0, %s28
      %s29 = sphi 0, %s26
      %s30 = sphi 0, %s29
      %s46 = sphi 0, %s30
      %s50 = sphi 0, %s50
      %s52 = sphi 0, %s50
      %s53 = sphi 0, %s52
      %s67 = sphi 0, %s53
      %s71 = sphi 0, %s71
      %s73 = sphi 0, %s71
      %s74 = sphi 0, %s73
      %s88 = sphi 0, %s74
      %s92 = sphi 0, %s92
      %s94 = sphi 0, %s92
      %s95 = sphi 0, %s94
      %s109 = sphi 0, %s95
      %s113 = sphi 0, %s113
      %s115 = sphi 0, %s113
      %s116 = sphi 0, %s115
      %s130 = sphi 0, %s116
      %s134 = sphi 0, %s134
      %s136 = sphi 0, %s134
      %s137 = sphi 0, %s136
      %s151 = sphi 0, %s137
      %s155 = sphi 0, %s155
      %s157 = sphi 0, %s155
      %s158 = sphi 0, %s157
      %s172 = sphi 0, %s158
      %s178 = sphi 0, %s180
      %s181 = sphi 0, %s178
      %s182 = sphi 0, %s181
      %s198 = sphi 0, %s182
    $region4: #{tpu_custom_call.1} parent=1 // loop_header_branch
      %19 = sbr.rel (%p17) target = $region8
    $region5: #{tpu_custom_call.1} parent=1 // loop_body
      %s21 = ssub.s32 %s16, 1
      %s22 = ssub.s32 %s16, 2
      %s23 = sadd.s32 %s16, 1
      %s24 = ssub.s32 %s16, %s23
      %p25 = scmp.eq.s32.totalorder %s24, 0
      %s27 = sadd.s32 %s26, 1
      %s28 = scalar_select %p25, %s26, %s27
      %p31 = pneg %p25
      %p32 = scmp.eq.s32.totalorder %s16, 1
      %p33 = por %p31, %p32
      %p34 = scmp.ne.s32.totalorder %s26, %s29
      %p35 = scmp.eq.s32.totalorder %s16, 0
      %p36 = por %p34, %p35
      %p37 = scmp.ne.s32.totalorder %s26, %s29
      %p38 = scmp.eq.s32.totalorder %s21, 1
      %p39 = por %p37, %p38
      %p40 = scmp.ne.s32.totalorder %s29, %s30
      %p41 = scmp.eq.s32.totalorder %s21, 0
      %p42 = por %p40, %p41
      %p43 = scmp.ne.s32.totalorder %s29, %s30
      %p44 = scmp.eq.s32.totalorder %s22, 1
      %p45 = por %p43, %p44
      %p47 = scmp.ne.s32.totalorder %s30, %s46
      %p48 = scmp.eq.s32.totalorder %s22, 0
      %p49 = por %p47, %p48
      %s51 = sadd.s32 %s50, 1
      %p54 = scmp.eq.s32.totalorder %s16, 1
      %p55 = scmp.ne.s32.totalorder %s50, %s52
      %p56 = scmp.eq.s32.totalorder %s16, 0
      %p57 = por %p55, %p56
      %p58 = scmp.ne.s32.totalorder %s50, %s52
      %p59 = scmp.eq.s32.totalorder %s21, 1
      %p60 = por %p58, %p59
      %p61 = scmp.ne.s32.totalorder %s52, %s53
      %p62 = scmp.eq.s32.totalorder %s21, 0
      %p63 = por %p61, %p62
      %p64 = scmp.ne.s32.totalorder %s52, %s53
      %p65 = scmp.eq.s32.totalorder %s22, 1
      %p66 = por %p64, %p65
      %p68 = scmp.ne.s32.totalorder %s53, %s67
      %p69 = scmp.eq.s32.totalorder %s22, 0
      %p70 = por %p68, %p69
      %s72 = sadd.s32 %s71, 1
      %p75 = scmp.eq.s32.totalorder %s16, 1
      %p76 = scmp.ne.s32.totalorder %s71, %s73
      %p77 = scmp.eq.s32.totalorder %s16, 0
      %p78 = por %p76, %p77
      %p79 = scmp.ne.s32.totalorder %s71, %s73
      %p80 = scmp.eq.s32.totalorder %s21, 1
      %p81 = por %p79, %p80
      %p82 = scmp.ne.s32.totalorder %s73, %s74
      %p83 = scmp.eq.s32.totalorder %s21, 0
      %p84 = por %p82, %p83
      %p85 = scmp.ne.s32.totalorder %s73, %s74
      %p86 = scmp.eq.s32.totalorder %s22, 1
      %p87 = por %p85, %p86
      %p89 = scmp.ne.s32.totalorder %s74, %s88
      %p90 = scmp.eq.s32.totalorder %s22, 0
      %p91 = por %p89, %p90
      %s93 = sadd.s32 %s92, 1
      %p96 = scmp.eq.s32.totalorder %s16, 1
      %p97 = scmp.ne.s32.totalorder %s92, %s94
      %p98 = scmp.eq.s32.totalorder %s16, 0
      %p99 = por %p97, %p98
      %p100 = scmp.ne.s32.totalorder %s92, %s94
      %p101 = scmp.eq.s32.totalorder %s21, 1
      %p102 = por %p100, %p101
      %p103 = scmp.ne.s32.totalorder %s94, %s95
      %p104 = scmp.eq.s32.totalorder %s21, 0
      %p105 = por %p103, %p104
      %p106 = scmp.ne.s32.totalorder %s94, %s95
      %p107 = scmp.eq.s32.totalorder %s22, 1
      %p108 = por %p106, %p107
      %p110 = scmp.ne.s32.totalorder %s95, %s109
      %p111 = scmp.eq.s32.totalorder %s22, 0
      %p112 = por %p110, %p111
      %s114 = sadd.s32 %s113, 1
      %p117 = scmp.eq.s32.totalorder %s16, 1
      %p118 = scmp.ne.s32.totalorder %s113, %s115
      %p119 = scmp.eq.s32.totalorder %s16, 0
      %p120 = por %p118, %p119
      %p121 = scmp.ne.s32.totalorder %s113, %s115
      %p122 = scmp.eq.s32.totalorder %s21, 1
      %p123 = por %p121, %p122
      %p124 = scmp.ne.s32.totalorder %s115, %s116
      %p125 = scmp.eq.s32.totalorder %s21, 0
      %p126 = por %p124, %p125
      %p127 = scmp.ne.s32.totalorder %s115, %s116
      %p128 = scmp.eq.s32.totalorder %s22, 1
      %p129 = por %p127, %p128
      %p131 = scmp.ne.s32.totalorder %s116, %s130
      %p132 = scmp.eq.s32.totalorder %s22, 0
      %p133 = por %p131, %p132
      %s135 = sadd.s32 %s134, 1
      %p138 = scmp.eq.s32.totalorder %s16, 1
      %p139 = scmp.ne.s32.totalorder %s134, %s136
      %p140 = scmp.eq.s32.totalorder %s16, 0
      %p141 = por %p139, %p140
      %p142 = scmp.ne.s32.totalorder %s134, %s136
      %p143 = scmp.eq.s32.totalorder %s21, 1
      %p144 = por %p142, %p143
      %p145 = scmp.ne.s32.totalorder %s136, %s137
      %p146 = scmp.eq.s32.totalorder %s21, 0
      %p147 = por %p145, %p146
      %p148 = scmp.ne.s32.totalorder %s136, %s137
      %p149 = scmp.eq.s32.totalorder %s22, 1
      %p150 = por %p148, %p149
      %p152 = scmp.ne.s32.totalorder %s137, %s151
      %p153 = scmp.eq.s32.totalorder %s22, 0
      %p154 = por %p152, %p153
      %s156 = sadd.s32 %s155, 1
      %p159 = scmp.eq.s32.totalorder %s16, 1
      %p160 = scmp.ne.s32.totalorder %s155, %s157
      %p161 = scmp.eq.s32.totalorder %s16, 0
      %p162 = por %p160, %p161
      %p163 = scmp.ne.s32.totalorder %s155, %s157
      %p164 = scmp.eq.s32.totalorder %s21, 1
      %p165 = por %p163, %p164
      %p166 = scmp.ne.s32.totalorder %s157, %s158
      %p167 = scmp.eq.s32.totalorder %s21, 0
      %p168 = por %p166, %p167
      %p169 = scmp.ne.s32.totalorder %s157, %s158
      %p170 = scmp.eq.s32.totalorder %s22, 1
      %p171 = por %p169, %p170
      %p173 = scmp.ne.s32.totalorder %s158, %s172
      %p174 = scmp.eq.s32.totalorder %s22, 0
      %p175 = por %p173, %p174
      %s176 = ssub.s32 %s16, %s23
      %p177 = scmp.eq.s32.totalorder %s176, 0
      %s179 = sadd.s32 %s178, 1
      %s180 = scalar_select %p177, %s178, %s179
      %p183 = pneg %p177
      %p184 = scmp.eq.s32.totalorder %s16, 1
      %p185 = por %p183, %p184
      %p186 = scmp.ne.s32.totalorder %s178, %s181
      %p187 = scmp.eq.s32.totalorder %s16, 0
      %p188 = por %p186, %p187
      %p189 = scmp.ne.s32.totalorder %s178, %s181
      %p190 = scmp.eq.s32.totalorder %s21, 1
      %p191 = por %p189, %p190
      %p192 = scmp.ne.s32.totalorder %s181, %s182
      %p193 = scmp.eq.s32.totalorder %s21, 0
      %p194 = por %p192, %p193
      %p195 = scmp.ne.s32.totalorder %s181, %s182
      %p196 = scmp.eq.s32.totalorder %s22, 1
      %p197 = por %p195, %p196
      %p199 = scmp.ne.s32.totalorder %s182, %s198
      %p200 = scmp.eq.s32.totalorder %s22, 0
      %p201 = por %p199, %p200
      %p202 = scmp.le.s32.totalorder 1, %s16
      %p203 = scmp.lt.s32.totalorder %s16, 3
      %p204 = pnand %p202, %p203
      %p205 = pneg %p204
      // Predicated region
      $region9: #{tpu_custom_call.1} parent=5 // pred_check
        _
      $region10: #{tpu_custom_call.1} parent=5 // pred_check_branch
        %207 = sbr.rel (%p204) target = $region12
      $region11: #{tpu_custom_call.1} parent=5 // pred_region
        %s208 = ssub.s32 %s16, 1
        // Predicated region
        $region13: #{tpu_custom_call.1} parent=11 // pred_check
          %p209 = pneg %p63
        $region14: #{tpu_custom_call.1} parent=11 // pred_check_branch
          %211 = sbr.rel (%p209) target = $region16
        $region15: #{tpu_custom_call.1} parent=11 // pred_region
          _
        $region16: #{tpu_custom_call.1} parent=11 // pred_fallthru
          _
        // Predicated region
        $region17: #{tpu_custom_call.1} parent=11 // pred_check
          %p212 = pneg %p84
        $region18: #{tpu_custom_call.1} parent=11 // pred_check_branch
          %214 = sbr.rel (%p212) target = $region20
        $region19: #{tpu_custom_call.1} parent=11 // pred_region
          _
        $region20: #{tpu_custom_call.1} parent=11 // pred_fallthru
          _
        // Predicated region
        $region21: #{tpu_custom_call.1} parent=11 // pred_check
          %p215 = pneg %p105
        $region22: #{tpu_custom_call.1} parent=11 // pred_check_branch
          %217 = sbr.rel (%p215) target = $region24
        $region23: #{tpu_custom_call.1} parent=11 // pred_region
          _
        $region24: #{tpu_custom_call.1} parent=11 // pred_fallthru
          _
        // Predicated region
        $region25: #{tpu_custom_call.1} parent=11 // pred_check
          %p218 = pneg %p126
        $region26: #{tpu_custom_call.1} parent=11 // pred_check_branch
          %220 = sbr.rel (%p218) target = $region28
        $region27: #{tpu_custom_call.1} parent=11 // pred_region
          _
        $region28: #{tpu_custom_call.1} parent=11 // pred_fallthru
          _
        // Predicated region
        $region29: #{tpu_custom_call.1} parent=11 // pred_check
          %p221 = pneg %p147
        $region30: #{tpu_custom_call.1} parent=11 // pred_check_branch
          %223 = sbr.rel (%p221) target = $region32
        $region31: #{tpu_custom_call.1} parent=11 // pred_region
          _
        $region32: #{tpu_custom_call.1} parent=11 // pred_fallthru
          _
        // Predicated region
        $region33: #{tpu_custom_call.1} parent=11 // pred_check
          %p224 = pneg %p168
        $region34: #{tpu_custom_call.1} parent=11 // pred_check_branch
          %226 = sbr.rel (%p224) target = $region36
        $region35: #{tpu_custom_call.1} parent=11 // pred_region
          _
        $region36: #{tpu_custom_call.1} parent=11 // pred_fallthru
          _
      $region12: #{tpu_custom_call.1} parent=5 // pred_fallthru
        _
      %p227 = scmp.lt.s32.totalorder %s16, 2
      // Predicated region
      $region37: #{tpu_custom_call.1} parent=5 // pred_check
        %p228 = pneg %p227
      $region38: #{tpu_custom_call.1} parent=5 // pred_check_branch
        %230 = sbr.rel (%p228) target = $region40
      $region39: #{tpu_custom_call.1} parent=5 // pred_region
        // Predicated region
        $region41: #{tpu_custom_call.1} parent=39 // pred_check
          %p231 = pneg %p36
        $region42: #{tpu_custom_call.1} parent=39 // pred_check_branch
          %233 = sbr.rel (%p231) target = $region44
        $region43: #{tpu_custom_call.1} parent=39 // pred_region
          %s234 = smul.u32 2, %s16
          %s235 = ssub.s32 3, %s234
          %p236 = scmp.lt.s32.totalorder %s235, 2
          %s237 = scalar_select %p236, %s235, 2
          %s238 = smul.u32 32, %s237
          %p239 = scmp.lt.s32.totalorder %s234, 2
          %s240 = scalar_select %p239, %s234, 2
          %s241 = smul.addr %s240, 2
          %s242 = scalar_lea.vmem %s0, %s241
          %s243 = smul.u32 2, %s16
          %s244 = ssub.s32 3, %s243
          %p245 = scmp.lt.s32.totalorder %s244, 2
          %s246 = scalar_select %p245, %s244, 2
          %s247 = smul.u32 32, %s246
        $region44: #{tpu_custom_call.1} parent=39 // pred_fallthru
          _
      $region40: #{tpu_custom_call.1} parent=5 // pred_fallthru
        _
      %p248 = scmp.le.s32.totalorder 1, %s16
      %p249 = scmp.lt.s32.totalorder %s16, 3
      %p250 = pnand %p248, %p249
      %p251 = pneg %p250
      // Predicated region
      $region45: #{tpu_custom_call.1} parent=5 // pred_check
        _
      $region46: #{tpu_custom_call.1} parent=5 // pred_check_branch
        %253 = sbr.rel (%p250) target = $region48
      $region47: #{tpu_custom_call.1} parent=5 // pred_region
        %s254 = ssub.s32 %s16, 1
        %s255 = smul.u32 2, %s21
        %s256 = ssub.s32 3, %s255
        %p257 = scmp.lt.s32.totalorder %s256, 2
        %s258 = scalar_select %p257, %s256, 2
        %s259 = smul.u32 32, %s258
        %p260 = scmp.lt.s32.totalorder %s255, 2
        %s261 = scalar_select %p260, %s255, 2
        %s262 = smul.addr %s261, 2
        %s263 = scalar_lea.vmem %s0, %s262
        %p264 = pneg %p42
        %p265 = pneg %p39
        %p266 = pneg %p63
        %p267 = pneg %p60
        %p268 = pneg %p84
        %p269 = pneg %p81
        %p270 = pneg %p105
        %p271 = pneg %p102
        %p272 = pneg %p126
        %p273 = pneg %p123
        %p274 = pneg %p147
        %p275 = pneg %p144
        %p276 = pneg %p168
        %p277 = pneg %p165
        %p278 = pneg %p194
        %p279 = pneg %p191
        %s280 = sand.u32 %s181, 1
        %s281 = scalar_lea.sflag [#allocation3], %s280
        %s282 = sand.u32 %s181, 1
        %s283 = smul.addr %s282, 8
        %s284 = scalar_lea.vmem [#allocation2], %s283
        %s285 = smul.u32 2, %s21
        %s286 = ssub.s32 3, %s285
        %p287 = scmp.lt.s32.totalorder %s286, 2
        %s288 = scalar_select %p287, %s286, 2
        %s289 = smul.u32 32, %s288
        %p290 = scmp.lt.s32.totalorder %s285, 2
        %s291 = scalar_select %p290, %s285, 2
        %s292 = smul.addr %s291, 2
        %s293 = scalar_lea.vmem %s0, %s292
        %s294 = smul.u32 2, %s21
        %s295 = ssub.s32 3, %s294
        %p296 = scmp.lt.s32.totalorder %s295, 2
        %s297 = scalar_select %p296, %s295, 2
        %s298 = smul.u32 32, %s297
        %s299 = smul.u32 2, %s21
        %s300 = ssub.s32 3, %s299
        %p301 = scmp.lt.s32.totalorder %s300, 2
        %s302 = scalar_select %p301, %s300, 2
        %s303 = smul.u32 64, %s302
        %v304 = vld [vmem:[%s293] sm:$0xf]
        %v305 = vld [vmem:[%s1] sm:$0x1f]
        %v306 = vld [vmem:[%s2] sm:$0x1f]
        %308 = vset.pattern.permute.xlu0 0
        %309 = vperm.xlu0 %308, %v306
        %v310 = vpop.permute.xlu0 %309
        %313 = vset.pattern.permute.xlu0 0
        %314 = vperm.xlu0 %313, %v305
        %v315 = vpop.permute.xlu0 %314
        %v318 = vlaneseq
        %v319 = vshrl.u32 %v318, 7
        %v320 = vsub.s32 0, %v319
        %v321 = vrot.slane %v304, %v320
        %v322 = vlaneseq
        %v323 = vshrl.u32 %v322, 7
        %v324 = vsub.s32 2, %v323
        %v325 = vrot.slane %v304, %v324
        %v328 = vlaneseq
        %v329 = vshrl.u32 %v328, 7
        %v330 = vsub.s32 0, %v329
        %v331 = vrot.slane %v321, %v330
        %v332 = vlaneseq
        %v333 = vshrl.u32 %v332, 7
        %v334 = vsub.s32 0, %v333
        %v335 = vrot.slane %v325, %v334
        %v336 = vmul.f32 %v315, %v331
        %v337 = vmul.f32 %v315, %v335
        %v338 = vadd.f32 %v310, %v336
        %v339 = vadd.f32 %v310, %v337
        %340 = vset.pattern.permute.xlu0 1
        %341 = vperm.xlu0 %340, %v305
        %v342 = vpop.permute.xlu0 %341
        %v344 = vlaneseq
        %v345 = vshrl.u32 %v344, 7
        %v346 = vsub.s32 1, %v345
        %v347 = vrot.slane %v304, %v346
        %v348 = vlaneseq
        %v349 = vshrl.u32 %v348, 7
        %v350 = vsub.s32 3, %v349
        %v351 = vrot.slane %v304, %v350
        %v354 = vlaneseq
        %v355 = vshrl.u32 %v354, 7
        %v356 = vsub.s32 1, %v355
        %v357 = vrot.slane %v347, %v356
        %v358 = vlaneseq
        %v359 = vshrl.u32 %v358, 7
        %v360 = vsub.s32 1, %v359
        %v361 = vrot.slane %v351, %v360
        %v362 = vmul.f32 %v342, %v357
        %v363 = vmul.f32 %v342, %v361
        %v364 = vadd.f32 %v338, %v362
        %v365 = vadd.f32 %v339, %v363
        %v366 = vmul.f32 %v364, 0.5
        %v367 = vmul.f32 %v365, 0.5
        %v368 = vtanh.pop %v366
        %v369 = vtanh.pop %v367
        %v370 = vmul.f32 %v368, 0.5
        %v371 = vmul.f32 %v369, 0.5
        %v372 = vadd.f32 %v370, 0.5
        %v373 = vadd.f32 %v371, 0.5
        %v374 = vld [vmem:[%s3] sm:$0xf]
        %v375 = vld [vmem:[%s4] sm:$0xf]
        %377 = vset.pattern.permute.xlu0 0
        %378 = vperm.xlu0 %377, %v375
        %v379 = vpop.permute.xlu0 %378
        %382 = vset.pattern.permute.xlu0 0
        %383 = vperm.xlu0 %382, %v374
        %v384 = vpop.permute.xlu0 %383
        %v386 = vlaneseq
        %v387 = vshrl.u32 %v386, 7
        %v388 = vsub.s32 0, %v387
        %v389 = vrot.slane %v372, %v388
        %v390 = vlaneseq
        %v391 = vshrl.u32 %v390, 7
        %v392 = vsub.s32 0, %v391
        %v393 = vrot.slane %v373, %v392
        %v394 = vmul.f32 %v384, %v389
        %v395 = vmul.f32 %v384, %v393
        %v396 = vadd.f32 %v379, %v394
        %v397 = vadd.f32 %v379, %v395
        %398 = vset.pattern.permute.xlu0 1
        %399 = vperm.xlu0 %398, %v374
        %v400 = vpop.permute.xlu0 %399
        %v402 = vlaneseq
        %v403 = vshrl.u32 %v402, 7
        %v404 = vsub.s32 1, %v403
        %v405 = vrot.slane %v372, %v404
        %v406 = vlaneseq
        %v407 = vshrl.u32 %v406, 7
        %v408 = vsub.s32 1, %v407
        %v409 = vrot.slane %v373, %v408
        %v410 = vmul.f32 %v400, %v405
        %v411 = vmul.f32 %v400, %v409
        %v412 = vadd.f32 %v396, %v410
        %v413 = vadd.f32 %v397, %v411
        %414 = vset.pattern.permute.xlu0 2
        %415 = vperm.xlu0 %414, %v374
        %v416 = vpop.permute.xlu0 %415
        %v418 = vlaneseq
        %v419 = vshrl.u32 %v418, 7
        %v420 = vsub.s32 2, %v419
        %v421 = vrot.slane %v372, %v420
        %v422 = vlaneseq
        %v423 = vshrl.u32 %v422, 7
        %v424 = vsub.s32 2, %v423
        %v425 = vrot.slane %v373, %v424
        %v426 = vmul.f32 %v416, %v421
        %v427 = vmul.f32 %v416, %v425
        %v428 = vadd.f32 %v412, %v426
        %v429 = vadd.f32 %v413, %v427
        %430 = vset.pattern.permute.xlu0 3
        %431 = vperm.xlu0 %430, %v374
        %v432 = vpop.permute.xlu0 %431
        %v434 = vlaneseq
        %v435 = vshrl.u32 %v434, 7
        %v436 = vsub.s32 3, %v435
        %v437 = vrot.slane %v372, %v436
        %v438 = vlaneseq
        %v439 = vshrl.u32 %v438, 7
        %v440 = vsub.s32 3, %v439
        %v441 = vrot.slane %v373, %v440
        %v442 = vmul.f32 %v432, %v437
        %v443 = vmul.f32 %v432, %v441
        %v444 = vadd.f32 %v428, %v442
        %v445 = vadd.f32 %v429, %v443
        %446 = vset.pattern.permute.xlu0 4
        %447 = vperm.xlu0 %446, %v374
        %v448 = vpop.permute.xlu0 %447
        %v450 = vlaneseq
        %v451 = vshrl.u32 %v450, 7
        %v452 = vsub.s32 4, %v451
        %v453 = vrot.slane %v372, %v452
        %v454 = vlaneseq
        %v455 = vshrl.u32 %v454, 7
        %v456 = vsub.s32 4, %v455
        %v457 = vrot.slane %v373, %v456
        %v458 = vmul.f32 %v448, %v453
        %v459 = vmul.f32 %v448, %v457
        %v460 = vadd.f32 %v444, %v458
        %v461 = vadd.f32 %v445, %v459
        %v462 = vmul.f32 %v460, 0.5
        %v463 = vmul.f32 %v461, 0.5
        %v464 = vtanh.pop %v462
        %v465 = vtanh.pop %v463
        %v466 = vmul.f32 %v464, 0.5
        %v467 = vmul.f32 %v465, 0.5
        %v468 = vadd.f32 %v466, 0.5
        %v469 = vadd.f32 %v467, 0.5
        %v470 = vld [vmem:[%s5] sm:$0x7]
        %v471 = vld [vmem:[%s6] sm:$0x7]
        %473 = vset.pattern.permute.xlu0 0
        %474 = vperm.xlu0 %473, %v471
        %v475 = vpop.permute.xlu0 %474
        %478 = vset.pattern.permute.xlu0 0
        %479 = vperm.xlu0 %478, %v470
        %v480 = vpop.permute.xlu0 %479
        %v482 = vlaneseq
        %v483 = vshrl.u32 %v482, 7
        %v484 = vsub.s32 0, %v483
        %v485 = vrot.slane %v468, %v484
        %v486 = vlaneseq
        %v487 = vshrl.u32 %v486, 7
        %v488 = vsub.s32 0, %v487
        %v489 = vrot.slane %v469, %v488
        %v490 = vmul.f32 %v480, %v485
        %v491 = vmul.f32 %v480, %v489
        %v492 = vadd.f32 %v475, %v490
        %v493 = vadd.f32 %v475, %v491
        %494 = vset.pattern.permute.xlu0 1
        %495 = vperm.xlu0 %494, %v470
        %v496 = vpop.permute.xlu0 %495
        %v498 = vlaneseq
        %v499 = vshrl.u32 %v498, 7
        %v500 = vsub.s32 1, %v499
        %v501 = vrot.slane %v468, %v500
        %v502 = vlaneseq
        %v503 = vshrl.u32 %v502, 7
        %v504 = vsub.s32 1, %v503
        %v505 = vrot.slane %v469, %v504
        %v506 = vmul.f32 %v496, %v501
        %v507 = vmul.f32 %v496, %v505
        %v508 = vadd.f32 %v492, %v506
        %v509 = vadd.f32 %v493, %v507
        %510 = vset.pattern.permute.xlu0 2
        %511 = vperm.xlu0 %510, %v470
        %v512 = vpop.permute.xlu0 %511
        %v514 = vlaneseq
        %v515 = vshrl.u32 %v514, 7
        %v516 = vsub.s32 2, %v515
        %v517 = vrot.slane %v468, %v516
        %v518 = vlaneseq
        %v519 = vshrl.u32 %v518, 7
        %v520 = vsub.s32 2, %v519
        %v521 = vrot.slane %v469, %v520
        %v522 = vmul.f32 %v512, %v517
        %v523 = vmul.f32 %v512, %v521
        %v524 = vadd.f32 %v508, %v522
        %v525 = vadd.f32 %v509, %v523
        %526 = vset.pattern.permute.xlu0 3
        %527 = vperm.xlu0 %526, %v470
        %v528 = vpop.permute.xlu0 %527
        %v530 = vlaneseq
        %v531 = vshrl.u32 %v530, 7
        %v532 = vsub.s32 3, %v531
        %v533 = vrot.slane %v468, %v532
        %v534 = vlaneseq
        %v535 = vshrl.u32 %v534, 7
        %v536 = vsub.s32 3, %v535
        %v537 = vrot.slane %v469, %v536
        %v538 = vmul.f32 %v528, %v533
        %v539 = vmul.f32 %v528, %v537
        %v540 = vadd.f32 %v524, %v538
        %v541 = vadd.f32 %v525, %v539
        %vm542 = vcmask 1042432
        %v543 = vsel %vm542, %v540, -inf
        %v544 = vrot.slane %v543, 4
        %v545 = vmax.f32 %v543, %v544
        %v546 = vrot.slane %v545, 2
        %v547 = vmax.f32 %v545, %v546
        %v548 = vrot.slane %v547, 1
        %v549 = vmax.f32 %v547, %v548
        %v550 = vsel %vm542, %v541, -inf
        %v551 = vrot.slane %v550, 4
        %v552 = vmax.f32 %v550, %v551
        %v553 = vrot.slane %v552, 2
        %v554 = vmax.f32 %v552, %v553
        %v555 = vrot.slane %v554, 1
        %v556 = vmax.f32 %v554, %v555
        %v557 = vsub.f32 %v540, %v549
        %v558 = vsub.f32 %v541, %v556
        %v559 = vmul.f32 %v557, 1.442695
        %v560 = vpow.pop %v559
        %v561 = vmul.f32 %v558, 1.442695
        %v562 = vpow.pop %v561
        %v563 = vsel %vm542, %v560, 0.0
        %v564 = vrot.slane %v563, 4
        %v565 = vadd.f32 %v563, %v564
        %v566 = vrot.slane %v565, 2
        %v567 = vadd.f32 %v565, %v566
        %v568 = vrot.slane %v567, 1
        %v569 = vadd.f32 %v567, %v568
        %v570 = vsel %vm542, %v562, 0.0
        %v571 = vrot.slane %v570, 4
        %v572 = vadd.f32 %v570, %v571
        %v573 = vrot.slane %v572, 2
        %v574 = vadd.f32 %v572, %v573
        %v575 = vrot.slane %v574, 1
        %v576 = vadd.f32 %v574, %v575
        %v577 = vrcp.pop %v569
        %v578 = vrcp.pop %v576
        %v579 = vmul.f32 %v569, %v577
        %v580 = vmul.f32 %v576, %v578
        %v581 = vsub.f32 2.0, %v579
        %v582 = vsub.f32 2.0, %v580
        %v583 = vmul.f32 %v577, %v581
        %v584 = vmul.f32 %v578, %v582
        %v585 = vmul.f32 %v560, %v583
        %v586 = vmul.f32 %v562, %v584
        %v589 = vcombine.low %v585, %v586
        %591 = vst [vmem:[%s284] sm:$0x77] %v589
        %s592 = sand.u32 %s181, 1
        %s593 = scalar_lea.sflag [#allocation3], %s592
        %s594 = sand.u32 %s181, 1
        %s595 = smul.addr %s594, 8
        %s596 = scalar_lea.vmem [#allocation2], %s595
        // Predicated region
        $region49: #{tpu_custom_call.1} parent=47 // pred_check
          %p597 = pneg %p191
        $region50: #{tpu_custom_call.1} parent=47 // pred_check_branch
          %599 = sbr.rel (%p597) target = $region52
        $region51: #{tpu_custom_call.1} parent=47 // pred_region
          %s600 = smul.u32 2, %s21
          %s601 = ssub.s32 3, %s600
          %p602 = scmp.lt.s32.totalorder %s601, 2
          %s603 = scalar_select %p602, %s601, 2
          %s604 = smul.u32 64, %s603
          %s606 = ssub.s32 128, %s604
          %607 = vsyncadd %s593, %s606
          %p608 = scmp.ne.s32.totalorder 0, %s604
          %s609 = smul.addr %s600, 64
          %s610 = scalar_lea.hbm %s7, %s609
          %s611 = smul.u32 %s603, 4
          %s612 = sshll.u32 %s611, 4
          %s613 = sshll.u32 %s596, 4
          %s614 = int_to_ptr.vmem [resolvable:$true] %s613
          %616 = dma.vmem_to_hbm [thread:$0]  (%p608), %s614, %s612, %s610, %s593
        $region52: #{tpu_custom_call.1} parent=47 // pred_fallthru
          _
      $region48: #{tpu_custom_call.1} parent=5 // pred_fallthru
        _
      %p617 = scmp.le.s32.totalorder 2, %s16
      // Predicated region
      $region53: #{tpu_custom_call.1} parent=5 // pred_check
        %p618 = pneg %p617
      $region54: #{tpu_custom_call.1} parent=5 // pred_check_branch
        %620 = sbr.rel (%p618) target = $region56
      $region55: #{tpu_custom_call.1} parent=5 // pred_region
        %s621 = ssub.s32 %s16, 2
        // Predicated region
        $region57: #{tpu_custom_call.1} parent=55 // pred_check
          %p622 = pneg %p197
        $region58: #{tpu_custom_call.1} parent=55 // pred_check_branch
          %624 = sbr.rel (%p622) target = $region60
        $region59: #{tpu_custom_call.1} parent=55 // pred_region
          %s625 = sand.u32 %s182, 1
          %s626 = scalar_lea.sflag [#allocation3], %s625
          %s627 = sand.u32 %s182, 1
          %s628 = smul.addr %s627, 8
          %s629 = scalar_lea.vmem [#allocation2], %s628
          %630 = dma.done %s626, 128
        $region60: #{tpu_custom_call.1} parent=55 // pred_fallthru
          _
      $region56: #{tpu_custom_call.1} parent=5 // pred_fallthru
        _
    $region6: #{tpu_custom_call.1} parent=1 // loop_footer
      %s20 = sadd.s32 1, %s16
    $region7: #{tpu_custom_call.1} parent=1 // loop_footer_branch
      %15 = sbr.rel target = $region3
    $region8: #{tpu_custom_call.1} parent=1 // loop_exit
      _
    %631 = vsyncpa [#allocation3], 1
    %s632 = scalar_lea.sflag [#allocation3], 1
    %633 = vsyncpa %s632, 1

</llo_original>
